<compile_context>
chip_gen: v7x
topology: tpu7x:2x2x1
jax: 0.10.0
libtpu: 0.0.40
codegen_flags: <defaults>
</compile_context>

<pallas_src>
import functools

import numpy as np
import jax
import jax.numpy as jnp
from jax.experimental import pallas as pl
from jax.experimental.pallas import tpu as pltpu

BN_EPS = 1e-5


def _round_up(x, m):
    return (x + m - 1) // m * m


def conv_kernel(*refs, k, p, TH, Wo, apply_act):
    """One (image, row-tile) step: k*k shifted matmuls + fused BN + SiLU."""
    if p > 0:
        xa_ref, xb_ref, w_ref, s_ref, b_ref, o_ref, band_ref = refs
        # Assemble a contiguous (TH + 2p) row band: tile t plus a 2p-row halo from tile t+1.
        band_ref[0:TH] = xa_ref[0]
        band_ref[TH:TH + 2 * p] = xb_ref[0]

        def get_patch(i, j):
            return band_ref[i:i + TH, j:j + Wo, :]
    else:
        xa_ref, w_ref, s_ref, b_ref, o_ref = refs

        def get_patch(i, j):
            return xa_ref[0, i:i + TH, j:j + Wo, :]

    C1p = w_ref.shape[1]
    C2p = o_ref.shape[3]

    acc = jnp.zeros((TH * Wo, C2p), jnp.float32)
    for i in range(k):
        for j in range(k):
            patch = get_patch(i, j).reshape(TH * Wo, C1p)          # bf16
            acc = acc + jnp.dot(patch, w_ref[i * k + j],           # bf16 MXU, f32 accumulate
                                preferred_element_type=jnp.float32)

    z = acc * s_ref[...] + b_ref[...]                               # fused BN (eval)
    if apply_act:
        z = z * (1.0 / (1.0 + jnp.exp(-z)))                         # SiLU
    o_ref[0] = z.reshape(TH, Wo, C2p).astype(o_ref.dtype)


def conv_bn_silu(x_nchw, weight_oihw, gamma, beta, mean, var, *,
                 k, s=1, g=1, act=True, eps=BN_EPS, row_tile=None):
    """Fused Conv+BN+SiLU.  x: (N, C1, H, W) f32 NCHW.  weight: (C2, C1, k, k) (OIHW, no bias)."""
    assert s == 1, "TODO(synk): stride > 1 not implemented in-kernel"
    assert g == 1, "TODO(synk): grouped conv not implemented in-kernel"
    assert k % 2 == 1, "only odd kernel sizes (autopad) supported"

    N, C1, H, W = x_nchw.shape
    C2 = weight_oihw.shape[0]
    assert weight_oihw.shape == (C2, C1, k, k)

    p = k // 2                       # autopad
    Ho, Wo = H, W                    # stride 1, 'same' padding
    C1p = _round_up(C1, 128)         # lane-dense channels
    C2p = _round_up(C2, 128)

    # ---- row tile: aim for >=256 matmul rows per step (fills the MXU M dim), bounded by VMEM ----
    if row_tile is None:
        row_tile = max(8, pl.cdiv(256, Wo))
    TH = min(row_tile, 64, max(Ho, 1))
    if p > 0:
        TH = max(TH, 2 * p)          # halo must fit inside a single neighbouring row tile
        TH = _round_up(TH, 2 * p)    # keep the 2p-row halo block index integral
    To = pl.cdiv(Ho, TH)             # number of row tiles
    Ho_pad = To * TH
    Hin = (To + 1) * TH if p > 0 else Ho_pad
    Win = Wo + 2 * p

    # ---- one-time padding / layout / dtype prep in XLA (no in-kernel memsets) ----
    x = jnp.transpose(x_nchw, (0, 2, 3, 1))                                   # NCHW -> NHWC
    x_pad = jnp.zeros((N, Hin, Win, C1p), jnp.bfloat16)
    x_pad = x_pad.at[:, p:p + H, p:p + W, :C1].set(x.astype(jnp.bfloat16))

    # OIHW -> per-tap (C1, C2) matrices packed as (k*k, C1p, C2p), bf16.
    w_taps = jnp.transpose(weight_oihw, (2, 3, 1, 0)).reshape(k * k, C1, C2)
    w_pad = jnp.zeros((k * k, C1p, C2p), jnp.bfloat16)
    w_pad = w_pad.at[:, :C1, :C2].set(w_taps.astype(jnp.bfloat16))

    scale = gamma / jnp.sqrt(var + eps)                                       # eval-mode BN fused
    bias = beta - mean * scale
    s_pad = jnp.zeros((1, C2p), jnp.float32).at[0, :C2].set(scale)
    b_pad = jnp.zeros((1, C2p), jnp.float32).at[0, :C2].set(bias)

    kernel = functools.partial(conv_kernel, k=k, p=p, TH=TH, Wo=Wo, apply_act=bool(act))

    x_specs = [pl.BlockSpec((1, TH, Win, C1p), lambda n, t: (n, t, 0, 0))]
    operands = [x_pad]
    scratch = []
    if p > 0:
        # Same array again: a 2p-row-high block starting at row (t+1)*TH -> the halo rows only.
        th_blk = TH // (2 * p)
        x_specs.append(pl.BlockSpec((1, 2 * p, Win, C1p),
                                    lambda n, t: (n, (t + 1) * th_blk, 0, 0)))
        operands.append(x_pad)
        scratch.append(pltpu.VMEM((TH + 2 * p, Win, C1p), jnp.bfloat16))

    out = pl.pallas_call(
        kernel,
        out_shape=jax.ShapeDtypeStruct((N, Ho_pad, Wo, C2p), jnp.float32),
        grid=(N, To),
        in_specs=x_specs + [
            pl.BlockSpec((k * k, C1p, C2p), lambda n, t: (0, 0, 0)),   # packed conv weights
            pl.BlockSpec((1, C2p), lambda n, t: (0, 0)),               # BN scale
            pl.BlockSpec((1, C2p), lambda n, t: (0, 0)),               # BN bias
        ],
        out_specs=pl.BlockSpec((1, TH, Wo, C2p), lambda n, t: (n, t, 0, 0)),
        scratch_shapes=scratch,
        compiler_params=pltpu.CompilerParams(
            dimension_semantics=("parallel", "parallel")),
    )(*operands, w_pad, s_pad, b_pad)

    out = out[:, :Ho, :, :C2]                                                 # drop row / channel padding
    return jnp.transpose(out, (0, 3, 1, 2))                                   # NHWC -> NCHW


def conv_ref(x_nchw, w_oihw, gamma, beta, mean, var, *, k, act=True, eps=BN_EPS):
    """Pure-JAX reference (inputs quantized to bf16 like the kernel, math in f32)."""
    p = k // 2
    xq = x_nchw.astype(jnp.bfloat16).astype(jnp.float32)
    wq = w_oihw.astype(jnp.bfloat16).astype(jnp.float32)
    x = jnp.transpose(xq, (0, 2, 3, 1))
    w = jnp.transpose(wq, (2, 3, 1, 0))                                       # OIHW -> HWIO
    y = jax.lax.conv_general_dilated(
        x, w, (1, 1), ((p, p), (p, p)),
        dimension_numbers=('NHWC', 'HWIO', 'NHWC'),
        precision=jax.lax.Precision.HIGHEST)
    scale = gamma / jnp.sqrt(var + eps)
    bias = beta - mean * scale
    y = y * scale + bias
    if act:
        y = y * jax.nn.sigmoid(y)
    return jnp.transpose(y, (0, 3, 1, 2))


if __name__ == "__main__":
    key = jax.random.PRNGKey(0)
    N, C1, C2, H, W = 2, 4, 8, 16, 16          # PyTorch NCHW input: (2, 4, 16, 16)

    for k in (1, 3):                           # module default k=1, plus the common YOLO k=3 case
        keys = jax.random.split(jax.random.fold_in(key, k), 6)
        x = jax.random.normal(keys[0], (N, C1, H, W), jnp.float32)
        w = jax.random.normal(keys[1], (C2, C1, k, k), jnp.float32) * 0.3
        gamma = jax.random.uniform(keys[2], (C2,), jnp.float32, 0.5, 1.5)
        beta = jax.random.normal(keys[3], (C2,), jnp.float32) * 0.1
        mean = jax.random.normal(keys[4], (C2,), jnp.float32) * 0.1
        var = jax.random.uniform(keys[5], (C2,), jnp.float32, 0.5, 1.5)

        out = conv_bn_silu(x, w, gamma, beta, mean, var, k=k)
        jax.block_until_ready(out)

        ref = conv_ref(x, w, gamma, beta, mean, var, k=k)
        np.testing.assert_allclose(np.asarray(out), np.asarray(ref), atol=2e-4, rtol=2e-3)

    print("KERNEL_OK")
</pallas_src>

<mosaic_0001>
module attributes {stable_mosaic.version = 11 : i64} {
  func.func @conv_kernel(%arg0: i32, %arg1: i32, %arg2: memref<1x16x16x128xbf16, #tpu.memory_space<vmem>>, %arg3: memref<1x128x128xbf16, #tpu.memory_space<vmem>>, %arg4: memref<1x128xf32, #tpu.memory_space<vmem>>, %arg5: memref<1x128xf32, #tpu.memory_space<vmem>>, %arg6: memref<1x16x16x128xf32, #tpu.memory_space<vmem>>) attributes {dimension_semantics = [#tpu.dimension_semantics<parallel>, #tpu.dimension_semantics<parallel>], iteration_bounds = array<i64: 2, 1>, scalar_prefetch = 0 : i64, scratch_operands = 0 : i64, tpu.core_type = #tpu.core_type<tc>, window_params = [{transform_indices = @transform_0, window_bounds = array<i64: 1, 16, 16, 128>}, {pipeline_mode = #tpu.pipeline_mode<synchronous>, transform_indices = @transform_1, window_bounds = array<i64: 1, 128, 128>}, {pipeline_mode = #tpu.pipeline_mode<synchronous>, transform_indices = @transform_2, window_bounds = array<i64: 1, 128>}, {pipeline_mode = #tpu.pipeline_mode<synchronous>, transform_indices = @transform_3, window_bounds = array<i64: 1, 128>}, {transform_indices = @transform_4, window_bounds = array<i64: 1, 16, 16, 128>}]} {
    %cst = arith.constant 0.000000e+00 : f32
    %0 = vector.broadcast %cst : f32 to vector<256x128xf32>
    %c0 = arith.constant 0 : index
    %c0_0 = arith.constant 0 : index
    %c0_1 = arith.constant 0 : index
    %c0_2 = arith.constant 0 : index
    %1 = vector.load %arg2[%c0, %c0_0, %c0_1, %c0_2] : memref<1x16x16x128xbf16, #tpu.memory_space<vmem>>, vector<1x16x16x128xbf16>
    %2 = vector.shape_cast %1 : vector<1x16x16x128xbf16> to vector<16x16x128xbf16>
    %3 = vector.shape_cast %2 : vector<16x16x128xbf16> to vector<256x128xbf16>
    %c0_3 = arith.constant 0 : index
    %c0_4 = arith.constant 0 : index
    %c0_5 = arith.constant 0 : index
    %4 = vector.load %arg3[%c0_3, %c0_4, %c0_5] : memref<1x128x128xbf16, #tpu.memory_space<vmem>>, vector<1x128x128xbf16>
    %5 = vector.shape_cast %4 : vector<1x128x128xbf16> to vector<128x128xbf16>
    %cst_6 = arith.constant dense<0.000000e+00> : vector<256x128xf32>
    %6 = tpu.matmul %3, %5, %cst_6 {dimension_numbers = #tpu.dot_dimension_numbers<[1], [0], [0], [1], [0, 0, 1, 1], [], []>} : vector<256x128xbf16>, vector<128x128xbf16>, vector<256x128xf32> -> vector<256x128xf32>
    %7 = arith.addf %0, %6 : vector<256x128xf32>
    %c0_7 = arith.constant 0 : index
    %c0_8 = arith.constant 0 : index
    %8 = vector.load %arg4[%c0_7, %c0_8] : memref<1x128xf32, #tpu.memory_space<vmem>>, vector<1x128xf32>
    %9 = vector.broadcast %8 : vector<1x128xf32> to vector<256x128xf32>
    %10 = arith.mulf %7, %9 : vector<256x128xf32>
    %c0_9 = arith.constant 0 : index
    %c0_10 = arith.constant 0 : index
    %11 = vector.load %arg5[%c0_9, %c0_10] : memref<1x128xf32, #tpu.memory_space<vmem>>, vector<1x128xf32>
    %12 = vector.broadcast %11 : vector<1x128xf32> to vector<256x128xf32>
    %13 = arith.addf %10, %12 : vector<256x128xf32>
    %cst_11 = arith.constant 0.000000e+00 : f32
    %14 = vector.broadcast %cst_11 : f32 to vector<256x128xf32>
    %15 = arith.subf %14, %13 : vector<256x128xf32>
    %16 = math.exp %15 : vector<256x128xf32>
    %cst_12 = arith.constant 1.000000e+00 : f32
    %17 = vector.broadcast %cst_12 : f32 to vector<256x128xf32>
    %18 = arith.addf %17, %16 : vector<256x128xf32>
    %cst_13 = arith.constant 1.000000e+00 : f32
    %19 = vector.broadcast %cst_13 : f32 to vector<256x128xf32>
    %20 = arith.divf %19, %18 : vector<256x128xf32>
    %21 = arith.mulf %13, %20 : vector<256x128xf32>
    %22 = vector.shape_cast %21 : vector<256x128xf32> to vector<16x16x128xf32>
    %c0_14 = arith.constant 0 : index
    %c0_15 = arith.constant 0 : index
    %c0_16 = arith.constant 0 : index
    %c0_17 = arith.constant 0 : index
    %23 = vector.load %arg6[%c0_14, %c0_15, %c0_16, %c0_17] : memref<1x16x16x128xf32, #tpu.memory_space<vmem>>, vector<1x16x16x128xf32>
    %24 = vector.shape_cast %23 : vector<1x16x16x128xf32> to vector<16x16x128xf32>
    %25 = vector.shape_cast %22 : vector<16x16x128xf32> to vector<1x16x16x128xf32>
    tpu.vector_store %arg6[%c0_14, %c0_15, %c0_16, %c0_17], %25 {strides = array<i32>} : memref<1x16x16x128xf32, #tpu.memory_space<vmem>>, vector<1x16x16x128xf32>,
    return
  }
  func.func @transform_0(%arg0: i32, %arg1: i32) -> (i32, i32, i32, i32) {
    %c0_i32 = arith.constant 0 : i32
    %c0_i32_0 = arith.constant 0 : i32
    %c0_i32_1 = arith.constant 0 : i32
    return %arg0, %arg1, %c0_i32, %c0_i32_0 : i32, i32, i32, i32
  }
  func.func @transform_1(%arg0: i32, %arg1: i32) -> (i32, i32, i32) {
    %c0_i32 = arith.constant 0 : i32
    %c0_i32_0 = arith.constant 0 : i32
    %c0_i32_1 = arith.constant 0 : i32
    %c0_i32_2 = arith.constant 0 : i32
    return %c0_i32, %c0_i32_0, %c0_i32_1 : i32, i32, i32
  }
  func.func @transform_2(%arg0: i32, %arg1: i32) -> (i32, i32) {
    %c0_i32 = arith.constant 0 : i32
    %c0_i32_0 = arith.constant 0 : i32
    %c0_i32_1 = arith.constant 0 : i32
    return %c0_i32, %c0_i32_0 : i32, i32
  }
  func.func @transform_3(%arg0: i32, %arg1: i32) -> (i32, i32) {
    %c0_i32 = arith.constant 0 : i32
    %c0_i32_0 = arith.constant 0 : i32
    %c0_i32_1 = arith.constant 0 : i32
    return %c0_i32, %c0_i32_0 : i32, i32
  }
  func.func @transform_4(%arg0: i32, %arg1: i32) -> (i32, i32, i32, i32) {
    %c0_i32 = arith.constant 0 : i32
    %c0_i32_0 = arith.constant 0 : i32
    %c0_i32_1 = arith.constant 0 : i32
    return %arg0, %arg1, %c0_i32, %c0_i32_0 : i32, i32, i32, i32
  }
}

</mosaic_0001>

<llo_original>
// kernel: tpu_custom_call.1
$region0: #{tpu_custom_call.1}
  #allocation0 [shape = 'u32[]', space=smem, size = 0x4, offset = 0x4, fixed_abs, tag = 'smem constant byte address 0x4 - core index']
  #allocation1 [shape = 'u32[144,128]{1,0:T(1,128)}', space=vmem, size = 0x12000, scoped, tag = 'internal scratch']
  %s0 = inlined_call_operand.hbm [shape: bf16[2,16,16,128], index: 0, kind: input, shape index: {}]
  %s1 = inlined_call_operand.hbm [shape: bf16[1,128,128], index: 1, kind: input, shape index: {}]
  %s2 = inlined_call_operand.vmem [shape: f32[1,128], index: 2, kind: input, shape index: {}]
  %s3 = inlined_call_operand.vmem [shape: f32[1,128], index: 3, kind: input, shape index: {}]
  %s4 = inlined_call_operand.hbm [shape: f32[2,16,16,128], index: 4, kind: output, shape index: {}]
  %s5 = sld [smem:[#allocation0]]
  $region57: #{tpu_custom_call.1} parent=0
    _
  %s7 = ssub.s32 1, %s5
  %s8 = scalar_select 0, %s7, %s5
  $region1: #{tpu_custom_call.1} parent=0
    #allocation2 [shape = 'u8[131072]{0}', space=vmem, size = 0x20000, scoped, tag = 'input window, operand 0']
    #allocation3 [shape = 's32[2]{0}', space=sflag, size = 0x8, scoped, tag = 'scoped memory for tpu_custom_call.1']
    #allocation4 [shape = 's32[2]{0}', space=sflag, size = 0x8, scoped, tag = 'scoped memory for tpu_custom_call.1']
    #allocation5 [shape = 'u8[32768]{0}', space=vmem, size = 0x8000, scoped, tag = 'input window, operand 1, single buffered']
    #allocation6 [shape = 's32[1]{0}', space=sflag, size = 0x4, scoped, tag = 'scoped memory for tpu_custom_call.1']
    #allocation7 [shape = 'u8[262144]{0}', space=vmem, size = 0x40000, scoped, tag = 'output window, operand 0']
    %9 = vsyncpa [#allocation3], 0
    %s10 = scalar_lea.sflag [#allocation3], 1
    %11 = vsyncpa %s10, 0
    %12 = vsyncpa [#allocation6], 0
    %13 = vsyncpa [#allocation4], 0
    %s14 = scalar_lea.sflag [#allocation4], 1
    %15 = vsyncpa %s14, 0
    loop: start=0, step=1, limit=4
    $region2: #{tpu_custom_call.1} parent=1 // loop_pre_header
      _
    $region3: #{tpu_custom_call.1} parent=1 // loop_header
      %s17 = sphi 0, %s21
      %p18 = scmp.ge.s32.totalorder %s17, 4
      %s24 = sphi 0, %s36
      %s25 = sphi 0, %s32
      %s26 = sphi 0, %s24
      %s27 = sphi 0, %s25
      %s28 = sphi 0, %s26
      %s29 = sphi 0, %s27
      %s41 = sphi 0, %s43
      %s44 = sphi 0, %s41
      %s45 = sphi 0, %s44
      %s61 = sphi 0, %s45
      %s65 = sphi 0, %s65
      %s67 = sphi 0, %s65
      %s68 = sphi 0, %s67
      %s82 = sphi 0, %s68
      %s86 = sphi 0, %s86
      %s88 = sphi 0, %s86
      %s89 = sphi 0, %s88
      %s103 = sphi 0, %s89
      %s107 = sphi 0, %s107
      %s109 = sphi 0, %s107
      %s110 = sphi 0, %s109
      %s124 = sphi 0, %s110
      %s132 = sphi 0, %s134
      %s135 = sphi 0, %s132
      %s136 = sphi 0, %s135
      %s152 = sphi 0, %s136
    $region4: #{tpu_custom_call.1} parent=1 // loop_header_branch
      %20 = sbr.rel (%p18) target = $region8
    $region5: #{tpu_custom_call.1} parent=1 // loop_body
      %s22 = ssub.s32 %s17, 1
      %s23 = ssub.s32 %s17, 2
      %s30 = sadd.s32 1, %s25
      %p31 = scmp.ge.s32.totalorder %s30, 1
      %s32 = scalar_select %p31, 0, %s30
      %s33 = sadd.s32 1, %s24
      %s34 = scalar_select %p31, %s33, %s24
      %p35 = scmp.ge.s32.totalorder %s34, 2
      %s36 = scalar_select %p35, 0, %s34
      %s37 = ssub.s32 %s24, %s36
      %s38 = ssub.s32 %s25, %s32
      %s39 = sor.u32 %s37, %s38
      %p40 = scmp.eq.s32.totalorder %s39, 0
      %s42 = sadd.s32 %s41, 1
      %s43 = scalar_select %p40, %s41, %s42
      %p46 = pneg %p40
      %p47 = scmp.eq.s32.totalorder %s17, 1
      %p48 = por %p46, %p47
      %p49 = scmp.ne.s32.totalorder %s41, %s44
      %p50 = scmp.eq.s32.totalorder %s17, 0
      %p51 = por %p49, %p50
      %p52 = scmp.ne.s32.totalorder %s41, %s44
      %p53 = scmp.eq.s32.totalorder %s22, 1
      %p54 = por %p52, %p53
      %p55 = scmp.ne.s32.totalorder %s44, %s45
      %p56 = scmp.eq.s32.totalorder %s22, 0
      %p57 = por %p55, %p56
      %p58 = scmp.ne.s32.totalorder %s44, %s45
      %p59 = scmp.eq.s32.totalorder %s23, 1
      %p60 = por %p58, %p59
      %p62 = scmp.ne.s32.totalorder %s45, %s61
      %p63 = scmp.eq.s32.totalorder %s23, 0
      %p64 = por %p62, %p63
      %s66 = sadd.s32 %s65, 1
      %p69 = scmp.eq.s32.totalorder %s17, 1
      %p70 = scmp.ne.s32.totalorder %s65, %s67
      %p71 = scmp.eq.s32.totalorder %s17, 0
      %p72 = por %p70, %p71
      %p73 = scmp.ne.s32.totalorder %s65, %s67
      %p74 = scmp.eq.s32.totalorder %s22, 1
      %p75 = por %p73, %p74
      %p76 = scmp.ne.s32.totalorder %s67, %s68
      %p77 = scmp.eq.s32.totalorder %s22, 0
      %p78 = por %p76, %p77
      %p79 = scmp.ne.s32.totalorder %s67, %s68
      %p80 = scmp.eq.s32.totalorder %s23, 1
      %p81 = por %p79, %p80
      %p83 = scmp.ne.s32.totalorder %s68, %s82
      %p84 = scmp.eq.s32.totalorder %s23, 0
      %p85 = por %p83, %p84
      %s87 = sadd.s32 %s86, 1
      %p90 = scmp.eq.s32.totalorder %s17, 1
      %p91 = scmp.ne.s32.totalorder %s86, %s88
      %p92 = scmp.eq.s32.totalorder %s17, 0
      %p93 = por %p91, %p92
      %p94 = scmp.ne.s32.totalorder %s86, %s88
      %p95 = scmp.eq.s32.totalorder %s22, 1
      %p96 = por %p94, %p95
      %p97 = scmp.ne.s32.totalorder %s88, %s89
      %p98 = scmp.eq.s32.totalorder %s22, 0
      %p99 = por %p97, %p98
      %p100 = scmp.ne.s32.totalorder %s88, %s89
      %p101 = scmp.eq.s32.totalorder %s23, 1
      %p102 = por %p100, %p101
      %p104 = scmp.ne.s32.totalorder %s89, %s103
      %p105 = scmp.eq.s32.totalorder %s23, 0
      %p106 = por %p104, %p105
      %s108 = sadd.s32 %s107, 1
      %p111 = scmp.eq.s32.totalorder %s17, 1
      %p112 = scmp.ne.s32.totalorder %s107, %s109
      %p113 = scmp.eq.s32.totalorder %s17, 0
      %p114 = por %p112, %p113
      %p115 = scmp.ne.s32.totalorder %s107, %s109
      %p116 = scmp.eq.s32.totalorder %s22, 1
      %p117 = por %p115, %p116
      %p118 = scmp.ne.s32.totalorder %s109, %s110
      %p119 = scmp.eq.s32.totalorder %s22, 0
      %p120 = por %p118, %p119
      %p121 = scmp.ne.s32.totalorder %s109, %s110
      %p122 = scmp.eq.s32.totalorder %s23, 1
      %p123 = por %p121, %p122
      %p125 = scmp.ne.s32.totalorder %s110, %s124
      %p126 = scmp.eq.s32.totalorder %s23, 0
      %p127 = por %p125, %p126
      %s128 = ssub.s32 %s24, %s36
      %s129 = ssub.s32 %s25, %s32
      %s130 = sor.u32 %s128, %s129
      %p131 = scmp.eq.s32.totalorder %s130, 0
      %s133 = sadd.s32 %s132, 1
      %s134 = scalar_select %p131, %s132, %s133
      %p137 = pneg %p131
      %p138 = scmp.eq.s32.totalorder %s17, 1
      %p139 = por %p137, %p138
      %p140 = scmp.ne.s32.totalorder %s132, %s135
      %p141 = scmp.eq.s32.totalorder %s17, 0
      %p142 = por %p140, %p141
      %p143 = scmp.ne.s32.totalorder %s132, %s135
      %p144 = scmp.eq.s32.totalorder %s22, 1
      %p145 = por %p143, %p144
      %p146 = scmp.ne.s32.totalorder %s135, %s136
      %p147 = scmp.eq.s32.totalorder %s22, 0
      %p148 = por %p146, %p147
      %p149 = scmp.ne.s32.totalorder %s135, %s136
      %p150 = scmp.eq.s32.totalorder %s23, 1
      %p151 = por %p149, %p150
      %p153 = scmp.ne.s32.totalorder %s136, %s152
      %p154 = scmp.eq.s32.totalorder %s23, 0
      %p155 = por %p153, %p154
      %p156 = scmp.le.s32.totalorder 1, %s17
      %p157 = scmp.lt.s32.totalorder %s17, 3
      %p158 = pnand %p156, %p157
      %p159 = pneg %p158
      // Predicated region
      $region9: #{tpu_custom_call.1} parent=5 // pred_check
        _
      $region10: #{tpu_custom_call.1} parent=5 // pred_check_branch
        %161 = sbr.rel (%p158) target = $region12
      $region11: #{tpu_custom_call.1} parent=5 // pred_region
        %s162 = ssub.s32 %s17, 1
        // Predicated region
        $region13: #{tpu_custom_call.1} parent=11 // pred_check
          %p163 = pneg %p78
        $region14: #{tpu_custom_call.1} parent=11 // pred_check_branch
          %165 = sbr.rel (%p163) target = $region16
        $region15: #{tpu_custom_call.1} parent=11 // pred_region
          %s167 = ssub.s32 1024, 1024
          %168 = vsyncadd [#allocation6], %s167
          %s169 = sshll.u32 [#allocation5], 4
          %s170 = int_to_ptr.vmem [resolvable:$true] %s169
          %175 = dma.hbm_to_vmem [thread:$0]  %s1, 1024, %s170, [#allocation6], 64, 64, 4
        $region16: #{tpu_custom_call.1} parent=11 // pred_fallthru
          _
        // Predicated region
        $region17: #{tpu_custom_call.1} parent=11 // pred_check
          %p176 = pneg %p99
        $region18: #{tpu_custom_call.1} parent=11 // pred_check_branch
          %178 = sbr.rel (%p176) target = $region20
        $region19: #{tpu_custom_call.1} parent=11 // pred_region
          _
        $region20: #{tpu_custom_call.1} parent=11 // pred_fallthru
          _
        // Predicated region
        $region21: #{tpu_custom_call.1} parent=11 // pred_check
          %p179 = pneg %p120
        $region22: #{tpu_custom_call.1} parent=11 // pred_check_branch
          %181 = sbr.rel (%p179) target = $region24
        $region23: #{tpu_custom_call.1} parent=11 // pred_region
          _
        $region24: #{tpu_custom_call.1} parent=11 // pred_fallthru
          _
      $region12: #{tpu_custom_call.1} parent=5 // pred_fallthru
        _
      %p182 = scmp.lt.s32.totalorder %s17, 2
      // Predicated region
      $region25: #{tpu_custom_call.1} parent=5 // pred_check
        %p183 = pneg %p182
      $region26: #{tpu_custom_call.1} parent=5 // pred_check_branch
        %185 = sbr.rel (%p183) target = $region28
      $region27: #{tpu_custom_call.1} parent=5 // pred_region
        // Predicated region
        $region29: #{tpu_custom_call.1} parent=27 // pred_check
          %p186 = pneg %p51
        $region30: #{tpu_custom_call.1} parent=27 // pred_check_branch
          %188 = sbr.rel (%p186) target = $region32
        $region31: #{tpu_custom_call.1} parent=27 // pred_region
          %s189 = sand.u32 %s41, 1
          %s190 = scalar_lea.sflag [#allocation3], %s189
          %s191 = sand.u32 %s41, 1
          %s192 = smul.addr %s191, 128
          %s193 = scalar_lea.vmem [#allocation2], %s192
          %s194 = smul.u32 16, %s25
          %s196 = ssub.s32 2048, 2048
          %197 = vsyncadd %s190, %s196
          %s198 = smul.addr %s194, 2
          %s199 = smul.addr %s24, 32
          %s200 = sadd.s32 %s198, %s199
          %s201 = smul.addr %s200, 64
          %s202 = scalar_lea.hbm %s0, %s201
          %s203 = sshll.u32 %s193, 4
          %s204 = int_to_ptr.vmem [resolvable:$true] %s203
          %209 = dma.hbm_to_vmem [thread:$0]  %s202, 2048, %s204, %s190, 64, 64, 4
        $region32: #{tpu_custom_call.1} parent=27 // pred_fallthru
          _
      $region28: #{tpu_custom_call.1} parent=5 // pred_fallthru
        _
      %p210 = scmp.le.s32.totalorder 1, %s17
      %p211 = scmp.lt.s32.totalorder %s17, 3
      %p212 = pnand %p210, %p211
      %p213 = pneg %p212
      // Predicated region
      $region33: #{tpu_custom_call.1} parent=5 // pred_check
        _
      $region34: #{tpu_custom_call.1} parent=5 // pred_check_branch
        %215 = sbr.rel (%p212) target = $region36
      $region35: #{tpu_custom_call.1} parent=5 // pred_region
        %s216 = ssub.s32 %s17, 1
        %s217 = sand.u32 %s44, 1
        %s218 = scalar_lea.sflag [#allocation3], %s217
        %s219 = sand.u32 %s44, 1
        %s220 = smul.addr %s219, 128
        %s221 = scalar_lea.vmem [#allocation2], %s220
        // Predicated region
        $region37: #{tpu_custom_call.1} parent=35 // pred_check
          %p222 = pneg %p57
        $region38: #{tpu_custom_call.1} parent=35 // pred_check_branch
          %224 = sbr.rel (%p222) target = $region40
        $region39: #{tpu_custom_call.1} parent=35 // pred_region
          %225 = dma.done %s218, 2048
        $region40: #{tpu_custom_call.1} parent=35 // pred_fallthru
          _
        // Predicated region
        $region41: #{tpu_custom_call.1} parent=35 // pred_check
          %p226 = pneg %p78
        $region42: #{tpu_custom_call.1} parent=35 // pred_check_branch
          %228 = sbr.rel (%p226) target = $region44
        $region43: #{tpu_custom_call.1} parent=35 // pred_region
          %229 = dma.done [#allocation6], 1024
        $region44: #{tpu_custom_call.1} parent=35 // pred_fallthru
          _
        %s230 = sand.u32 %s44, 1
        %s231 = scalar_lea.sflag [#allocation3], %s230
        %s232 = sand.u32 %s44, 1
        %s233 = smul.addr %s232, 128
        %s234 = scalar_lea.vmem [#allocation2], %s233
        %p235 = pneg %p57
        %p236 = pneg %p54
        %p237 = pneg %p78
        %p238 = pneg %p75
        %p239 = pneg %p99
        %p240 = pneg %p96
        %p241 = pneg %p120
        %p242 = pneg %p117
        %p243 = pneg %p148
        %p244 = pneg %p145
        %s245 = sand.u32 %s135, 1
        %s246 = scalar_lea.sflag [#allocation4], %s245
        %s247 = sand.u32 %s135, 1
        %s248 = smul.addr %s247, 256
        %s249 = scalar_lea.vmem [#allocation7], %s248
        %s250 = smul.u32 16, %s27
        %s251 = smul.u32 16, %s27
        %v253 = vld [vmem:[%s221] sm:$0xf]
        %v254 = vld [vmem:[%s221 + $0x4] sm:$0xf]
        %v255 = vld [vmem:[%s221 + $0x8] sm:$0xf]
        %v256 = vld [vmem:[%s221 + $0xc] sm:$0xf]
        %v257 = vld [vmem:[%s221 + $0x10] sm:$0xf]
        %v258 = vld [vmem:[%s221 + $0x14] sm:$0xf]
        %v259 = vld [vmem:[%s221 + $0x18] sm:$0xf]
        %v260 = vld [vmem:[%s221 + $0x1c] sm:$0xf]
        %v261 = vld [vmem:[%s221 + $0x20] sm:$0xf]
        %v262 = vld [vmem:[%s221 + $0x24] sm:$0xf]
        %v263 = vld [vmem:[%s221 + $0x28] sm:$0xf]
        %v264 = vld [vmem:[%s221 + $0x2c] sm:$0xf]
        %v265 = vld [vmem:[%s221 + $0x30] sm:$0xf]
        %v266 = vld [vmem:[%s221 + $0x34] sm:$0xf]
        %v267 = vld [vmem:[%s221 + $0x38] sm:$0xf]
        %v268 = vld [vmem:[%s221 + $0x3c] sm:$0xf]
        %v269 = vld [vmem:[%s221 + $0x40] sm:$0xf]
        %v270 = vld [vmem:[%s221 + $0x44] sm:$0xf]
        %v271 = vld [vmem:[%s221 + $0x48] sm:$0xf]
        %v272 = vld [vmem:[%s221 + $0x4c] sm:$0xf]
        %v273 = vld [vmem:[%s221 + $0x50] sm:$0xf]
        %v274 = vld [vmem:[%s221 + $0x54] sm:$0xf]
        %v275 = vld [vmem:[%s221 + $0x58] sm:$0xf]
        %v276 = vld [vmem:[%s221 + $0x5c] sm:$0xf]
        %v277 = vld [vmem:[%s221 + $0x60] sm:$0xf]
        %v278 = vld [vmem:[%s221 + $0x64] sm:$0xf]
        %v279 = vld [vmem:[%s221 + $0x68] sm:$0xf]
        %v280 = vld [vmem:[%s221 + $0x6c] sm:$0xf]
        %v281 = vld [vmem:[%s221 + $0x70] sm:$0xf]
        %v282 = vld [vmem:[%s221 + $0x74] sm:$0xf]
        %v283 = vld [vmem:[%s221 + $0x78] sm:$0xf]
        %v284 = vld [vmem:[%s221 + $0x7c] sm:$0xf]
        %v285 = vld [vmem:[#allocation5] sm:$0xf]
        %v286 = vld [vmem:[#allocation5 + $0x4] sm:$0xf]
        %v287 = vld [vmem:[#allocation5 + $0x8] sm:$0xf]
        %v288 = vld [vmem:[#allocation5 + $0xc] sm:$0xf]
        %v289 = vld [vmem:[#allocation5 + $0x10] sm:$0xf]
        %v290 = vld [vmem:[#allocation5 + $0x14] sm:$0xf]
        %v291 = vld [vmem:[#allocation5 + $0x18] sm:$0xf]
        %v292 = vld [vmem:[#allocation5 + $0x1c] sm:$0xf]
        %v293 = vld [vmem:[#allocation5 + $0x20] sm:$0xf]
        %v294 = vld [vmem:[#allocation5 + $0x24] sm:$0xf]
        %v295 = vld [vmem:[#allocation5 + $0x28] sm:$0xf]
        %v296 = vld [vmem:[#allocation5 + $0x2c] sm:$0xf]
        %v297 = vld [vmem:[#allocation5 + $0x30] sm:$0xf]
        %v298 = vld [vmem:[#allocation5 + $0x34] sm:$0xf]
        %v299 = vld [vmem:[#allocation5 + $0x38] sm:$0xf]
        %v300 = vld [vmem:[#allocation5 + $0x3c] sm:$0xf]
        %v333 = vunpack.c.l.b16 %v253
        %v334 = vunpack.c.l.b16 %v254
        %v335 = vunpack.c.l.b16 %v255
        %v336 = vunpack.c.l.b16 %v256
        %v337 = vunpack.c.l.b16 %v257
        %v338 = vunpack.c.l.b16 %v258
        %v339 = vunpack.c.l.b16 %v259
        %v340 = vunpack.c.l.b16 %v260
        %v341 = vunpack.c.l.b16 %v261
        %v342 = vunpack.c.l.b16 %v262
        %v343 = vunpack.c.l.b16 %v263
        %v344 = vunpack.c.l.b16 %v264
        %v345 = vunpack.c.l.b16 %v265
        %v346 = vunpack.c.l.b16 %v266
        %v347 = vunpack.c.l.b16 %v267
        %v348 = vunpack.c.l.b16 %v268
        %v349 = vunpack.c.l.b16 %v269
        %v350 = vunpack.c.l.b16 %v270
        %v351 = vunpack.c.l.b16 %v271
        %v352 = vunpack.c.l.b16 %v272
        %v353 = vunpack.c.l.b16 %v273
        %v354 = vunpack.c.l.b16 %v274
        %v355 = vunpack.c.l.b16 %v275
        %v356 = vunpack.c.l.b16 %v276
        %v357 = vunpack.c.l.b16 %v277
        %v358 = vunpack.c.l.b16 %v278
        %v359 = vunpack.c.l.b16 %v279
        %v360 = vunpack.c.l.b16 %v280
        %v361 = vunpack.c.l.b16 %v281
        %v362 = vunpack.c.l.b16 %v282
        %v363 = vunpack.c.l.b16 %v283
        %v364 = vunpack.c.l.b16 %v284
        %v365 = vpack.c.b16 %v334, %v333
        %v366 = vpack.c.b16 %v336, %v335
        %v367 = vpack.c.b16 %v338, %v337
        %v368 = vpack.c.b16 %v340, %v339
        %v369 = vpack.c.b16 %v342, %v341
        %v370 = vpack.c.b16 %v344, %v343
        %v371 = vpack.c.b16 %v346, %v345
        %v372 = vpack.c.b16 %v348, %v347
        %v373 = vpack.c.b16 %v350, %v349
        %v374 = vpack.c.b16 %v352, %v351
        %v375 = vpack.c.b16 %v354, %v353
        %v376 = vpack.c.b16 %v356, %v355
        %v377 = vpack.c.b16 %v358, %v357
        %v378 = vpack.c.b16 %v360, %v359
        %v379 = vpack.c.b16 %v362, %v361
        %v380 = vpack.c.b16 %v364, %v363
        %v413 = vunpack.c.l.b16 %v285
        %v414 = vunpack.c.l.b16 %v286
        %v415 = vunpack.c.l.b16 %v287
        %v416 = vunpack.c.l.b16 %v288
        %v417 = vunpack.c.l.b16 %v289
        %v418 = vunpack.c.l.b16 %v290
        %v419 = vunpack.c.l.b16 %v291
        %v420 = vunpack.c.l.b16 %v292
        %v421 = vunpack.c.l.b16 %v293
        %v422 = vunpack.c.l.b16 %v294
        %v423 = vunpack.c.l.b16 %v295
        %v424 = vunpack.c.l.b16 %v296
        %v425 = vunpack.c.l.b16 %v297
        %v426 = vunpack.c.l.b16 %v298
        %v427 = vunpack.c.l.b16 %v299
        %v428 = vunpack.c.l.b16 %v300
        %v429 = vpack.c.b16 %v414, %v413
        %v430 = vpack.c.b16 %v416, %v415
        %v431 = vpack.c.b16 %v418, %v417
        %v432 = vpack.c.b16 %v420, %v419
        %v433 = vpack.c.b16 %v422, %v421
        %v434 = vpack.c.b16 %v424, %v423
        %v435 = vpack.c.b16 %v426, %v425
        %v436 = vpack.c.b16 %v428, %v427
        %445 = vmatprep.subr.bf16.mxu0 0
        %446 = vmatpush1.bf16.msra.mxu0 %v429
        %447 = vmatprep.subr.bf16.mxu0 0
        %448 = vmatpush1.bf16.msra.mxu0 %v430
        %449 = vmatprep.subr.bf16.mxu0 0
        %450 = vmatpush1.bf16.msra.mxu0 %v431
        %451 = vmatprep.subr.bf16.mxu0 0
        %452 = vmatpush1.bf16.msra.mxu0 %v432
        %453 = vmatprep.subr.bf16.mxu0 0
        %454 = vmatpush1.bf16.msra.mxu0 %v433
        %455 = vmatprep.subr.bf16.mxu0 0
        %456 = vmatpush1.bf16.msra.mxu0 %v434
        %457 = vmatprep.subr.bf16.mxu0 0
        %458 = vmatpush1.bf16.msra.mxu0 %v435
        %459 = vmatprep.subr.bf16.mxu0 0
        %460 = vmatpush1.bf16.msra.mxu0 %v436
        %461 = vmatprep.subr.bf16.mxu0 0
        %462 = vmatpush1.bf16.msra.mxu0 0
        %463 = vmatprep.subr.bf16.mxu0 0
        %464 = vmatpush1.bf16.msra.mxu0 0
        %465 = vmatprep.subr.bf16.mxu0 0
        %466 = vmatpush1.bf16.msra.mxu0 0
        %467 = vmatprep.subr.bf16.mxu0 0
        %468 = vmatpush1.bf16.msra.mxu0 0
        %469 = vmatprep.subr.bf16.mxu0 0
        %470 = vmatpush1.bf16.msra.mxu0 0
        %471 = vmatprep.subr.bf16.mxu0 0
        %472 = vmatpush1.bf16.msra.mxu0 0
        %473 = vmatprep.subr.bf16.mxu0 0
        %474 = vmatpush1.bf16.msra.mxu0 0
        %475 = vmatprep.subr.bf16.mxu0 0
        %476 = vmatpush1.bf16.msra.mxu0 0
        %477 = vmatprep.mubr.bf16.mxu0 0
        %478 = vmatmul.mubr.bf16.gmra.mrb[0].mxu0 %v365
        %v479 = vpop.f32.mrb[0].mxu0
        %v480 = vadd.f32 0.0, %v479
        %v481 = vpop.f32.mrb[0].mxu0
        %v482 = vpop.f32.mrb[0].mxu0
        %v483 = vadd.f32 0.0, %v482
        %v484 = vpop.f32.mrb[0].mxu0
        %485 = vmatprep.mubr.bf16.mxu0 0
        %486 = vmatmul.mubr.bf16.gmra.mrb[0].mxu0 %v366
        %v487 = vpop.f32.mrb[0].mxu0
        %v488 = vadd.f32 0.0, %v487
        %v489 = vpop.f32.mrb[0].mxu0
        %v490 = vpop.f32.mrb[0].mxu0
        %v491 = vadd.f32 0.0, %v490
        %v492 = vpop.f32.mrb[0].mxu0
        %493 = vmatprep.mubr.bf16.mxu0 0
        %494 = vmatmul.mubr.bf16.gmra.mrb[0].mxu0 %v367
        %v495 = vpop.f32.mrb[0].mxu0
        %v496 = vadd.f32 0.0, %v495
        %v497 = vpop.f32.mrb[0].mxu0
        %v498 = vpop.f32.mrb[0].mxu0
        %v499 = vadd.f32 0.0, %v498
        %v500 = vpop.f32.mrb[0].mxu0
        %501 = vmatprep.mubr.bf16.mxu0 0
        %502 = vmatmul.mubr.bf16.gmra.mrb[0].mxu0 %v368
        %v503 = vpop.f32.mrb[0].mxu0
        %v504 = vadd.f32 0.0, %v503
        %v505 = vpop.f32.mrb[0].mxu0
        %v506 = vpop.f32.mrb[0].mxu0
        %v507 = vadd.f32 0.0, %v506
        %v508 = vpop.f32.mrb[0].mxu0
        %509 = vmatprep.mubr.bf16.mxu0 0
        %510 = vmatmul.mubr.bf16.gmra.mrb[0].mxu0 %v369
        %v511 = vpop.f32.mrb[0].mxu0
        %v512 = vadd.f32 0.0, %v511
        %v513 = vpop.f32.mrb[0].mxu0
        %v514 = vpop.f32.mrb[0].mxu0
        %v515 = vadd.f32 0.0, %v514
        %v516 = vpop.f32.mrb[0].mxu0
        %517 = vmatprep.mubr.bf16.mxu0 0
        %518 = vmatmul.mubr.bf16.gmra.mrb[0].mxu0 %v370
        %v519 = vpop.f32.mrb[0].mxu0
        %v520 = vadd.f32 0.0, %v519
        %v521 = vpop.f32.mrb[0].mxu0
        %v522 = vpop.f32.mrb[0].mxu0
        %v523 = vadd.f32 0.0, %v522
        %v524 = vpop.f32.mrb[0].mxu0
        %525 = vmatprep.mubr.bf16.mxu0 0
        %526 = vmatmul.mubr.bf16.gmra.mrb[0].mxu0 %v371
        %v527 = vpop.f32.mrb[0].mxu0
        %v528 = vadd.f32 0.0, %v527
        %v529 = vpop.f32.mrb[0].mxu0
        %v530 = vpop.f32.mrb[0].mxu0
        %v531 = vadd.f32 0.0, %v530
        %v532 = vpop.f32.mrb[0].mxu0
        %533 = vmatprep.mubr.bf16.mxu0 0
        %534 = vmatmul.mubr.bf16.gmra.mrb[0].mxu0 %v372
        %v535 = vpop.f32.mrb[0].mxu0
        %v536 = vadd.f32 0.0, %v535
        %v537 = vpop.f32.mrb[0].mxu0
        %v538 = vpop.f32.mrb[0].mxu0
        %v539 = vadd.f32 0.0, %v538
        %v540 = vpop.f32.mrb[0].mxu0
        %541 = vmatprep.mubr.bf16.mxu0 0
        %542 = vmatmul.mubr.bf16.gmra.mrb[0].mxu0 %v373
        %v543 = vpop.f32.mrb[0].mxu0
        %v544 = vadd.f32 0.0, %v543
        %v545 = vpop.f32.mrb[0].mxu0
        %v546 = vpop.f32.mrb[0].mxu0
        %v547 = vadd.f32 0.0, %v546
        %v548 = vpop.f32.mrb[0].mxu0
        %549 = vmatprep.mubr.bf16.mxu0 0
        %550 = vmatmul.mubr.bf16.gmra.mrb[0].mxu0 %v374
        %v551 = vpop.f32.mrb[0].mxu0
        %v552 = vadd.f32 0.0, %v551
        %v553 = vpop.f32.mrb[0].mxu0
        %v554 = vpop.f32.mrb[0].mxu0
        %v555 = vadd.f32 0.0, %v554
        %v556 = vpop.f32.mrb[0].mxu0
        %557 = vmatprep.mubr.bf16.mxu0 0
        %558 = vmatmul.mubr.bf16.gmra.mrb[0].mxu0 %v375
        %v559 = vpop.f32.mrb[0].mxu0
        %v560 = vadd.f32 0.0, %v559
        %v561 = vpop.f32.mrb[0].mxu0
        %v562 = vpop.f32.mrb[0].mxu0
        %v563 = vadd.f32 0.0, %v562
        %v564 = vpop.f32.mrb[0].mxu0
        %565 = vmatprep.mubr.bf16.mxu0 0
        %566 = vmatmul.mubr.bf16.gmra.mrb[0].mxu0 %v376
        %v567 = vpop.f32.mrb[0].mxu0
        %v568 = vadd.f32 0.0, %v567
        %v569 = vpop.f32.mrb[0].mxu0
        %v570 = vpop.f32.mrb[0].mxu0
        %v571 = vadd.f32 0.0, %v570
        %v572 = vpop.f32.mrb[0].mxu0
        %573 = vmatprep.mubr.bf16.mxu0 0
        %574 = vmatmul.mubr.bf16.gmra.mrb[0].mxu0 %v377
        %v575 = vpop.f32.mrb[0].mxu0
        %v576 = vadd.f32 0.0, %v575
        %v577 = vpop.f32.mrb[0].mxu0
        %v578 = vpop.f32.mrb[0].mxu0
        %v579 = vadd.f32 0.0, %v578
        %v580 = vpop.f32.mrb[0].mxu0
        %581 = vmatprep.mubr.bf16.mxu0 0
        %582 = vmatmul.mubr.bf16.gmra.mrb[0].mxu0 %v378
        %v583 = vpop.f32.mrb[0].mxu0
        %v584 = vadd.f32 0.0, %v583
        %v585 = vpop.f32.mrb[0].mxu0
        %v586 = vpop.f32.mrb[0].mxu0
        %v587 = vadd.f32 0.0, %v586
        %v588 = vpop.f32.mrb[0].mxu0
        %589 = vmatprep.mubr.bf16.mxu0 0
        %590 = vmatmul.mubr.bf16.gmra.mrb[0].mxu0 %v379
        %v591 = vpop.f32.mrb[0].mxu0
        %v592 = vadd.f32 0.0, %v591
        %v593 = vpop.f32.mrb[0].mxu0
        %v594 = vpop.f32.mrb[0].mxu0
        %v595 = vadd.f32 0.0, %v594
        %v596 = vpop.f32.mrb[0].mxu0
        %597 = vmatprep.mubr.bf16.mxu0 0
        %598 = vmatmul.mubr.bf16.gmra.mrb[0].mxu0 %v380
        %v599 = vpop.f32.mrb[0].mxu0
        %v600 = vadd.f32 0.0, %v599
        %v601 = vpop.f32.mrb[0].mxu0
        %v602 = vpop.f32.mrb[0].mxu0
        %v603 = vadd.f32 0.0, %v602
        %v604 = vpop.f32.mrb[0].mxu0
        %605 = vdwg.mxu0
        %v606 = vld [vmem:[%s2] sm:$0x1]
        %v608 = vlaneseq
        %v609 = vshrl.u32 %v608, 7
        %v610 = vsub.s32 0, %v609
        %v611 = vrot.slane %v606, %v610
        %v613 = vmul.f32 %v480, %v611
        %v614 = vmul.f32 %v483, %v611
        %v615 = vmul.f32 %v488, %v611
        %v616 = vmul.f32 %v491, %v611
        %v617 = vmul.f32 %v496, %v611
        %v618 = vmul.f32 %v499, %v611
        %v619 = vmul.f32 %v504, %v611
        %v620 = vmul.f32 %v507, %v611
        %v621 = vmul.f32 %v512, %v611
        %v622 = vmul.f32 %v515, %v611
        %v623 = vmul.f32 %v520, %v611
        %v624 = vmul.f32 %v523, %v611
        %v625 = vmul.f32 %v528, %v611
        %v626 = vmul.f32 %v531, %v611
        %v627 = vmul.f32 %v536, %v611
        %v628 = vmul.f32 %v539, %v611
        %v629 = vmul.f32 %v544, %v611
        %v630 = vmul.f32 %v547, %v611
        %v631 = vmul.f32 %v552, %v611
        %v632 = vmul.f32 %v555, %v611
        %v633 = vmul.f32 %v560, %v611
        %v634 = vmul.f32 %v563, %v611
        %v635 = vmul.f32 %v568, %v611
        %v636 = vmul.f32 %v571, %v611
        %v637 = vmul.f32 %v576, %v611
        %v638 = vmul.f32 %v579, %v611
        %v639 = vmul.f32 %v584, %v611
        %v640 = vmul.f32 %v587, %v611
        %v641 = vmul.f32 %v592, %v611
        %v642 = vmul.f32 %v595, %v611
        %v643 = vmul.f32 %v600, %v611
        %v644 = vmul.f32 %v603, %v611
        %v645 = vld [vmem:[%s3] sm:$0x1]
        %v647 = vlaneseq
        %v648 = vshrl.u32 %v647, 7
        %v649 = vsub.s32 0, %v648
        %v650 = vrot.slane %v645, %v649
        %v652 = vadd.f32 %v613, %v650
        %v653 = vadd.f32 %v614, %v650
        %v654 = vadd.f32 %v615, %v650
        %v655 = vadd.f32 %v616, %v650
        %v656 = vadd.f32 %v617, %v650
        %v657 = vadd.f32 %v618, %v650
        %v658 = vadd.f32 %v619, %v650
        %v659 = vadd.f32 %v620, %v650
        %v660 = vadd.f32 %v621, %v650
        %v661 = vadd.f32 %v622, %v650
        %v662 = vadd.f32 %v623, %v650
        %v663 = vadd.f32 %v624, %v650
        %v664 = vadd.f32 %v625, %v650
        %v665 = vadd.f32 %v626, %v650
        %v666 = vadd.f32 %v627, %v650
        %v667 = vadd.f32 %v628, %v650
        %v668 = vadd.f32 %v629, %v650
        %v669 = vadd.f32 %v630, %v650
        %v670 = vadd.f32 %v631, %v650
        %v671 = vadd.f32 %v632, %v650
        %v672 = vadd.f32 %v633, %v650
        %v673 = vadd.f32 %v634, %v650
        %v674 = vadd.f32 %v635, %v650
        %v675 = vadd.f32 %v636, %v650
        %v676 = vadd.f32 %v637, %v650
        %v677 = vadd.f32 %v638, %v650
        %v678 = vadd.f32 %v639, %v650
        %v679 = vadd.f32 %v640, %v650
        %v680 = vadd.f32 %v641, %v650
        %v681 = vadd.f32 %v642, %v650
        %v682 = vadd.f32 %v643, %v650
        %v683 = vadd.f32 %v644, %v650
        %v684 = vsub.f32 0.0, %v652
        %v685 = vsub.f32 0.0, %v653
        %v686 = vsub.f32 0.0, %v654
        %v687 = vsub.f32 0.0, %v655
        %v688 = vsub.f32 0.0, %v656
        %v689 = vsub.f32 0.0, %v657
        %v690 = vsub.f32 0.0, %v658
        %v691 = vsub.f32 0.0, %v659
        %v692 = vsub.f32 0.0, %v660
        %v693 = vsub.f32 0.0, %v661
        %v694 = vsub.f32 0.0, %v662
        %v695 = vsub.f32 0.0, %v663
        %v696 = vsub.f32 0.0, %v664
        %v697 = vsub.f32 0.0, %v665
        %v698 = vsub.f32 0.0, %v666
        %v699 = vsub.f32 0.0, %v667
        %v700 = vsub.f32 0.0, %v668
        %v701 = vsub.f32 0.0, %v669
        %v702 = vsub.f32 0.0, %v670
        %v703 = vsub.f32 0.0, %v671
        %v704 = vsub.f32 0.0, %v672
        %v705 = vsub.f32 0.0, %v673
        %v706 = vsub.f32 0.0, %v674
        %v707 = vsub.f32 0.0, %v675
        %v708 = vsub.f32 0.0, %v676
        %v709 = vsub.f32 0.0, %v677
        %v710 = vsub.f32 0.0, %v678
        %v711 = vsub.f32 0.0, %v679
        %v712 = vsub.f32 0.0, %v680
        %v713 = vsub.f32 0.0, %v681
        %v714 = vsub.f32 0.0, %v682
        %v715 = vsub.f32 0.0, %v683
        %v716 = vmul.f32 %v684, 1.442695
        %v717 = vpow.pop %v716
        %v718 = vmul.f32 %v685, 1.442695
        %v719 = vpow.pop %v718
        %v720 = vmul.f32 %v686, 1.442695
        %v721 = vpow.pop %v720
        %v722 = vmul.f32 %v687, 1.442695
        %v723 = vpow.pop %v722
        %v724 = vmul.f32 %v688, 1.442695
        %v725 = vpow.pop %v724
        %v726 = vmul.f32 %v689, 1.442695
        %v727 = vpow.pop %v726
        %v728 = vmul.f32 %v690, 1.442695
        %v729 = vpow.pop %v728
        %v730 = vmul.f32 %v691, 1.442695
        %v731 = vpow.pop %v730
        %v732 = vmul.f32 %v692, 1.442695
        %v733 = vpow.pop %v732
        %v734 = vmul.f32 %v693, 1.442695
        %v735 = vpow.pop %v734
        %v736 = vmul.f32 %v694, 1.442695
        %v737 = vpow.pop %v736
        %v738 = vmul.f32 %v695, 1.442695
        %v739 = vpow.pop %v738
        %v740 = vmul.f32 %v696, 1.442695
        %v741 = vpow.pop %v740
        %v742 = vmul.f32 %v697, 1.442695
        %v743 = vpow.pop %v742
        %v744 = vmul.f32 %v698, 1.442695
        %v745 = vpow.pop %v744
        %v746 = vmul.f32 %v699, 1.442695
        %v747 = vpow.pop %v746
        %v748 = vmul.f32 %v700, 1.442695
        %v749 = vpow.pop %v748
        %v750 = vmul.f32 %v701, 1.442695
        %v751 = vpow.pop %v750
        %v752 = vmul.f32 %v702, 1.442695
        %v753 = vpow.pop %v752
        %v754 = vmul.f32 %v703, 1.442695
        %v755 = vpow.pop %v754
        %v756 = vmul.f32 %v704, 1.442695
        %v757 = vpow.pop %v756
        %v758 = vmul.f32 %v705, 1.442695
        %v759 = vpow.pop %v758
        %v760 = vmul.f32 %v706, 1.442695
        %v761 = vpow.pop %v760
        %v762 = vmul.f32 %v707, 1.442695
        %v763 = vpow.pop %v762
        %v764 = vmul.f32 %v708, 1.442695
        %v765 = vpow.pop %v764
        %v766 = vmul.f32 %v709, 1.442695
        %v767 = vpow.pop %v766
        %v768 = vmul.f32 %v710, 1.442695
        %v769 = vpow.pop %v768
        %v770 = vmul.f32 %v711, 1.442695
        %v771 = vpow.pop %v770
        %v772 = vmul.f32 %v712, 1.442695
        %v773 = vpow.pop %v772
        %v774 = vmul.f32 %v713, 1.442695
        %v775 = vpow.pop %v774
        %v776 = vmul.f32 %v714, 1.442695
        %v777 = vpow.pop %v776
        %v778 = vmul.f32 %v715, 1.442695
        %v779 = vpow.pop %v778
        %v780 = vadd.f32 %v717, 1.0
        %v781 = vadd.f32 %v719, 1.0
        %v782 = vadd.f32 %v721, 1.0
        %v783 = vadd.f32 %v723, 1.0
        %v784 = vadd.f32 %v725, 1.0
        %v785 = vadd.f32 %v727, 1.0
        %v786 = vadd.f32 %v729, 1.0
        %v787 = vadd.f32 %v731, 1.0
        %v788 = vadd.f32 %v733, 1.0
        %v789 = vadd.f32 %v735, 1.0
        %v790 = vadd.f32 %v737, 1.0
        %v791 = vadd.f32 %v739, 1.0
        %v792 = vadd.f32 %v741, 1.0
        %v793 = vadd.f32 %v743, 1.0
        %v794 = vadd.f32 %v745, 1.0
        %v795 = vadd.f32 %v747, 1.0
        %v796 = vadd.f32 %v749, 1.0
        %v797 = vadd.f32 %v751, 1.0
        %v798 = vadd.f32 %v753, 1.0
        %v799 = vadd.f32 %v755, 1.0
        %v800 = vadd.f32 %v757, 1.0
        %v801 = vadd.f32 %v759, 1.0
        %v802 = vadd.f32 %v761, 1.0
        %v803 = vadd.f32 %v763, 1.0
        %v804 = vadd.f32 %v765, 1.0
        %v805 = vadd.f32 %v767, 1.0
        %v806 = vadd.f32 %v769, 1.0
        %v807 = vadd.f32 %v771, 1.0
        %v808 = vadd.f32 %v773, 1.0
        %v809 = vadd.f32 %v775, 1.0
        %v810 = vadd.f32 %v777, 1.0
        %v811 = vadd.f32 %v779, 1.0
        %v812 = vrcp.pop %v780
        %v813 = vmul.f32 1.0, %v812
        %v814 = vrcp.pop %v781
        %v815 = vmul.f32 1.0, %v814
        %v816 = vrcp.pop %v782
        %v817 = vmul.f32 1.0, %v816
        %v818 = vrcp.pop %v783
        %v819 = vmul.f32 1.0, %v818
        %v820 = vrcp.pop %v784
        %v821 = vmul.f32 1.0, %v820
        %v822 = vrcp.pop %v785
        %v823 = vmul.f32 1.0, %v822
        %v824 = vrcp.pop %v786
        %v825 = vmul.f32 1.0, %v824
        %v826 = vrcp.pop %v787
        %v827 = vmul.f32 1.0, %v826
        %v828 = vrcp.pop %v788
        %v829 = vmul.f32 1.0, %v828
        %v830 = vrcp.pop %v789
        %v831 = vmul.f32 1.0, %v830
        %v832 = vrcp.pop %v790
        %v833 = vmul.f32 1.0, %v832
        %v834 = vrcp.pop %v791
        %v835 = vmul.f32 1.0, %v834
        %v836 = vrcp.pop %v792
        %v837 = vmul.f32 1.0, %v836
        %v838 = vrcp.pop %v793
        %v839 = vmul.f32 1.0, %v838
        %v840 = vrcp.pop %v794
        %v841 = vmul.f32 1.0, %v840
        %v842 = vrcp.pop %v795
        %v843 = vmul.f32 1.0, %v842
        %v844 = vrcp.pop %v796
        %v845 = vmul.f32 1.0, %v844
        %v846 = vrcp.pop %v797
        %v847 = vmul.f32 1.0, %v846
        %v848 = vrcp.pop %v798
        %v849 = vmul.f32 1.0, %v848
        %v850 = vrcp.pop %v799
        %v851 = vmul.f32 1.0, %v850
        %v852 = vrcp.pop %v800
        %v853 = vmul.f32 1.0, %v852
        %v854 = vrcp.pop %v801
        %v855 = vmul.f32 1.0, %v854
        %v856 = vrcp.pop %v802
        %v857 = vmul.f32 1.0, %v856
        %v858 = vrcp.pop %v803
        %v859 = vmul.f32 1.0, %v858
        %v860 = vrcp.pop %v804
        %v861 = vmul.f32 1.0, %v860
        %v862 = vrcp.pop %v805
        %v863 = vmul.f32 1.0, %v862
        %v864 = vrcp.pop %v806
        %v865 = vmul.f32 1.0, %v864
        %v866 = vrcp.pop %v807
        %v867 = vmul.f32 1.0, %v866
        %v868 = vrcp.pop %v808
        %v869 = vmul.f32 1.0, %v868
        %v870 = vrcp.pop %v809
        %v871 = vmul.f32 1.0, %v870
        %v872 = vrcp.pop %v810
        %v873 = vmul.f32 1.0, %v872
        %v874 = vrcp.pop %v811
        %v875 = vmul.f32 1.0, %v874
        %v876 = vmul.f32 %v652, %v813
        %v877 = vmul.f32 %v653, %v815
        %v878 = vmul.f32 %v654, %v817
        %v879 = vmul.f32 %v655, %v819
        %v880 = vmul.f32 %v656, %v821
        %v881 = vmul.f32 %v657, %v823
        %v882 = vmul.f32 %v658, %v825
        %v883 = vmul.f32 %v659, %v827
        %v884 = vmul.f32 %v660, %v829
        %v885 = vmul.f32 %v661, %v831
        %v886 = vmul.f32 %v662, %v833
        %v887 = vmul.f32 %v663, %v835
        %v888 = vmul.f32 %v664, %v837
        %v889 = vmul.f32 %v665, %v839
        %v890 = vmul.f32 %v666, %v841
        %v891 = vmul.f32 %v667, %v843
        %v892 = vmul.f32 %v668, %v845
        %v893 = vmul.f32 %v669, %v847
        %v894 = vmul.f32 %v670, %v849
        %v895 = vmul.f32 %v671, %v851
        %v896 = vmul.f32 %v672, %v853
        %v897 = vmul.f32 %v673, %v855
        %v898 = vmul.f32 %v674, %v857
        %v899 = vmul.f32 %v675, %v859
        %v900 = vmul.f32 %v676, %v861
        %v901 = vmul.f32 %v677, %v863
        %v902 = vmul.f32 %v678, %v865
        %v903 = vmul.f32 %v679, %v867
        %v904 = vmul.f32 %v680, %v869
        %v905 = vmul.f32 %v681, %v871
        %v906 = vmul.f32 %v682, %v873
        %v907 = vmul.f32 %v683, %v875
        %908 = vst [vmem:[%s249] sm:$0xff] %v876
        %909 = vst [vmem:[%s249 + $0x8] sm:$0xff] %v877
        %910 = vst [vmem:[%s249 + $0x10] sm:$0xff] %v878
        %911 = vst [vmem:[%s249 + $0x18] sm:$0xff] %v879
        %912 = vst [vmem:[%s249 + $0x20] sm:$0xff] %v880
        %913 = vst [vmem:[%s249 + $0x28] sm:$0xff] %v881
        %914 = vst [vmem:[%s249 + $0x30] sm:$0xff] %v882
        %915 = vst [vmem:[%s249 + $0x38] sm:$0xff] %v883
        %916 = vst [vmem:[%s249 + $0x40] sm:$0xff] %v884
        %917 = vst [vmem:[%s249 + $0x48] sm:$0xff] %v885
        %918 = vst [vmem:[%s249 + $0x50] sm:$0xff] %v886
        %919 = vst [vmem:[%s249 + $0x58] sm:$0xff] %v887
        %920 = vst [vmem:[%s249 + $0x60] sm:$0xff] %v888
        %921 = vst [vmem:[%s249 + $0x68] sm:$0xff] %v889
        %922 = vst [vmem:[%s249 + $0x70] sm:$0xff] %v890
        %923 = vst [vmem:[%s249 + $0x78] sm:$0xff] %v891
        %924 = vst [vmem:[%s249 + $0x80] sm:$0xff] %v892
        %925 = vst [vmem:[%s249 + $0x88] sm:$0xff] %v893
        %926 = vst [vmem:[%s249 + $0x90] sm:$0xff] %v894
        %927 = vst [vmem:[%s249 + $0x98] sm:$0xff] %v895
        %928 = vst [vmem:[%s249 + $0xa0] sm:$0xff] %v896
        %929 = vst [vmem:[%s249 + $0xa8] sm:$0xff] %v897
        %930 = vst [vmem:[%s249 + $0xb0] sm:$0xff] %v898
        %931 = vst [vmem:[%s249 + $0xb8] sm:$0xff] %v899
        %932 = vst [vmem:[%s249 + $0xc0] sm:$0xff] %v900
        %933 = vst [vmem:[%s249 + $0xc8] sm:$0xff] %v901
        %934 = vst [vmem:[%s249 + $0xd0] sm:$0xff] %v902
        %935 = vst [vmem:[%s249 + $0xd8] sm:$0xff] %v903
        %936 = vst [vmem:[%s249 + $0xe0] sm:$0xff] %v904
        %937 = vst [vmem:[%s249 + $0xe8] sm:$0xff] %v905
        %938 = vst [vmem:[%s249 + $0xf0] sm:$0xff] %v906
        %939 = vst [vmem:[%s249 + $0xf8] sm:$0xff] %v907
        %s940 = sand.u32 %s135, 1
        %s941 = scalar_lea.sflag [#allocation4], %s940
        %s942 = sand.u32 %s135, 1
        %s943 = smul.addr %s942, 256
        %s944 = scalar_lea.vmem [#allocation7], %s943
        // Predicated region
        $region45: #{tpu_custom_call.1} parent=35 // pred_check
          %p945 = pneg %p145
        $region46: #{tpu_custom_call.1} parent=35 // pred_check_branch
          %947 = sbr.rel (%p945) target = $region48
        $region47: #{tpu_custom_call.1} parent=35 // pred_region
          %s948 = smul.u32 16, %s27
          %s950 = ssub.s32 4096, 4096
          %951 = vsyncadd %s941, %s950
          %s952 = smul.addr %s948, 2
          %s953 = smul.addr %s26, 32
          %s954 = sadd.s32 %s952, %s953
          %s955 = smul.addr %s954, 128
          %s956 = scalar_lea.hbm %s4, %s955
          %s957 = sshll.u32 %s944, 4
          %s958 = int_to_ptr.vmem [resolvable:$true] %s957
          %963 = dma.vmem_to_hbm [thread:$0]  %s958, 4096, %s956, %s941, 128, 128, 8
        $region48: #{tpu_custom_call.1} parent=35 // pred_fallthru
          _
      $region36: #{tpu_custom_call.1} parent=5 // pred_fallthru
        _
      %p964 = scmp.le.s32.totalorder 2, %s17
      // Predicated region
      $region49: #{tpu_custom_call.1} parent=5 // pred_check
        %p965 = pneg %p964
      $region50: #{tpu_custom_call.1} parent=5 // pred_check_branch
        %967 = sbr.rel (%p965) target = $region52
      $region51: #{tpu_custom_call.1} parent=5 // pred_region
        %s968 = ssub.s32 %s17, 2
        // Predicated region
        $region53: #{tpu_custom_call.1} parent=51 // pred_check
          %p969 = pneg %p151
        $region54: #{tpu_custom_call.1} parent=51 // pred_check_branch
          %971 = sbr.rel (%p969) target = $region56
        $region55: #{tpu_custom_call.1} parent=51 // pred_region
          %s972 = sand.u32 %s136, 1
          %s973 = scalar_lea.sflag [#allocation4], %s972
          %s974 = sand.u32 %s136, 1
          %s975 = smul.addr %s974, 256
          %s976 = scalar_lea.vmem [#allocation7], %s975
          %977 = dma.done %s973, 4096
        $region56: #{tpu_custom_call.1} parent=51 // pred_fallthru
          _
      $region52: #{tpu_custom_call.1} parent=5 // pred_fallthru
        _
    $region6: #{tpu_custom_call.1} parent=1 // loop_footer
      %s21 = sadd.s32 1, %s17
    $region7: #{tpu_custom_call.1} parent=1 // loop_footer_branch
      %16 = sbr.rel target = $region3
    $region8: #{tpu_custom_call.1} parent=1 // loop_exit
      _
    %978 = vsyncpa [#allocation3], 1
    %s979 = scalar_lea.sflag [#allocation3], 1
    %980 = vsyncpa %s979, 1
    %981 = vsyncpa [#allocation6], 1
    %982 = vsyncpa [#allocation4], 1
    %s983 = scalar_lea.sflag [#allocation4], 1
    %984 = vsyncpa %s983, 1

</llo_original>
